<compile_context>
chip_gen: v7x
topology: tpu7x:2x2x1
jax: 0.10.0
libtpu: 0.0.40
codegen_flags: <defaults>
</compile_context>

<pallas_src>
import functools
import math

import jax
import jax.numpy as jnp
from jax.experimental import pallas as pl
from jax.experimental.pallas import tpu as pltpu


_LN_10000 = math.log(10000.0)
_TARGET_TILE_BYTES = 4 * 1024 * 1024   # per-stream block; ~16 MiB live w/ double buffering
_VMEM_LIMIT_BYTES = 32 * 1024 * 1024   # explicit scoped-VMEM limit (> v5e 16 MiB default,
                                       # comfortably under v7x's 64 MiB physical VMEM)


def make_positional_encoding(seqlen: int, model_dim: int) -> jnp.ndarray:
    """Exact re-implementation of PositionalEncoder.__init__ buffer (float32).

    Faithful to the PyTorch module: sin on even *positions*, cos on odd
    *positions*, across ALL dims, with exponent d / model_dim
    (pe[0, 0::2, :] = sin(...), pe[0, 1::2, :] = cos(...)).
    """
    seq_vec = jnp.arange(seqlen, dtype=jnp.float32)[:, None]          # (S, 1)
    dim_vec = jnp.arange(model_dim, dtype=jnp.float32)                # (D,)
    div_vec = jnp.power(jnp.float32(10000.0), dim_vec / model_dim)    # (D,)
    angles = seq_vec / div_vec                                        # (S, D)
    is_even = (jnp.arange(seqlen) % 2 == 0)[:, None]                  # (S, 1)
    pe = jnp.where(is_even, jnp.sin(angles), jnp.cos(angles))         # (S, D)
    return pe[None].astype(jnp.float32)                               # (1, S, D)


def _pe_add_kernel(x_ref, o_ref, *, rows_per_block, lanes, model_dim, log2_d):
    """out = x + PE over one (1, rows_per_block, lanes) lane-dense tile.

    The PE is regenerated from the tile's global row index (program_id along the
    row-tile grid axis) and the lane index, so there is no second HBM stream.
    exp/sin/cos go to the EUP, integer index math to the VPU/scalar slots -- all
    idle in this HBM-bandwidth-bound add.
    """
    shape = x_ref.shape                                         # (1, TR, L)
    row = jax.lax.broadcasted_iota(jnp.int32, shape, 1)
    r_glob = pl.program_id(0) * rows_per_block + row            # row within the batch slab

    if lanes == model_dim:
        # Natural layout: one lane-row per sequence position.
        s = r_glob
        d_lane = jax.lax.broadcasted_iota(jnp.int32, (1, 1, lanes), 2)
    else:
        # Lane-packed layout: lanes // model_dim positions per 128-lane row.
        # model_dim divides 128 here => power of two => shift/mask index math.
        lane = jax.lax.broadcasted_iota(jnp.int32, shape, 2)
        s = r_glob * (lanes // model_dim) + (lane >> log2_d)
        d_lane = jax.lax.broadcasted_iota(jnp.int32, (1, 1, lanes), 2) & (model_dim - 1)

    # inv_div = 10000 ** (-d / model_dim): EUP exp on only O(lanes) elements
    # (hoisted out of the per-element path), then broadcast-multiplied on the VPU.
    inv_div = jnp.exp(d_lane.astype(jnp.float32) * jnp.float32(-_LN_10000 / model_dim))
    angle = s.astype(jnp.float32) * inv_div                     # (1, TR, L)
    pe = jnp.where((s & 1) == 0, jnp.sin(angle), jnp.cos(angle))
    o_ref[...] = (x_ref[...].astype(jnp.float32) + pe).astype(o_ref.dtype)


def positional_encoder(x: jnp.ndarray, seqlen: int, model_dim: int) -> jnp.ndarray:
    """Forward pass of PositionalEncoder: x (B, S, D) + pe (1, S, D) broadcast over B."""
    B, S, D = x.shape
    assert (S, D) == (seqlen, model_dim), "input shape must match (seqlen, model_dim)"

    itemsize = jnp.dtype(x.dtype).itemsize
    sublane = max(8, 32 // itemsize)        # 8 for f32, 16 for bf16, 32 for int8/fp8

    # Choose a lane-dense last dim (multiple of 128) whenever possible.
    if D % 128 == 0:
        lanes, log2_d = D, 0                                    # natural, lane-dense
    elif 128 % D == 0 and (S * D) % 128 == 0:
        lanes, log2_d = 128, int(math.log2(D))                  # pack positions into lanes
    else:
        lanes, log2_d = D, 0                                    # fallback: masked stores

    rows_per_batch = (S * D) // lanes
    x_view = x.reshape(B, rows_per_batch, lanes)                # free row-major view

    # Biggest row tile under the per-stream VMEM budget, sublane-aligned.
    max_rows = max(sublane, (_TARGET_TILE_BYTES // (lanes * itemsize)) // sublane * sublane)
    rows_per_block = min(rows_per_batch, max_rows)
    n_row_tiles = pl.cdiv(rows_per_batch, rows_per_block)

    kernel = functools.partial(
        _pe_add_kernel,
        rows_per_block=rows_per_block,
        lanes=lanes,
        model_dim=D,
        log2_d=log2_d,
    )

    block = (1, rows_per_block, lanes)
    out_view = pl.pallas_call(
        kernel,
        out_shape=jax.ShapeDtypeStruct((B, rows_per_batch, lanes), x.dtype),
        grid_spec=pltpu.PrefetchScalarGridSpec(
            num_scalar_prefetch=0,
            # Row-tile axis outermost so even a B=1 call has >=2 parallel blocks
            # to split across the two v7x TensorCores.
            grid=(n_row_tiles, B),
            in_specs=[pl.BlockSpec(block, lambda r, b: (b, r, 0))],
            out_specs=pl.BlockSpec(block, lambda r, b: (b, r, 0)),
        ),
        compiler_params=pltpu.CompilerParams(
            dimension_semantics=("parallel", "parallel"),
            vmem_limit_bytes=_VMEM_LIMIT_BYTES,
        ),
    )(x_view)
    return out_view.reshape(B, S, D)


if __name__ == "__main__":
    key = jax.random.PRNGKey(0)

    # 1) Module-sized smoke test (D < 128 -> lane-packed path: (B, S*D/128, 128)).
    B, S, D = 2, 8, 32
    x = jax.random.normal(key, (B, S, D), dtype=jnp.float32)
    out = jax.block_until_ready(positional_encoder(x, S, D))
    ref = x + make_positional_encoding(S, D)
    assert out.shape == (B, S, D)
    assert jnp.allclose(out, ref, atol=1e-4, rtol=1e-4)

    # 2) Realistic-layout test (D % 128 == 0 -> natural lane-dense path).
    B2, S2, D2 = 2, 64, 256
    x2 = jax.random.normal(jax.random.PRNGKey(1), (B2, S2, D2), dtype=jnp.float32)
    out2 = jax.block_until_ready(positional_encoder(x2, S2, D2))
    ref2 = x2 + make_positional_encoding(S2, D2)
    assert jnp.allclose(out2, ref2, atol=1e-4, rtol=1e-4)

    print("KERNEL_OK")
</pallas_src>

<mosaic_0001>
module attributes {stable_mosaic.version = 11 : i64} {
  func.func @_pe_add_kernel(%arg0: i32, %arg1: i32, %arg2: memref<1x2x128xf32, #tpu.memory_space<vmem>>, %arg3: memref<1x2x128xf32, #tpu.memory_space<vmem>>) attributes {dimension_semantics = [#tpu.dimension_semantics<parallel>, #tpu.dimension_semantics<parallel>], iteration_bounds = array<i64: 1, 2>, scalar_prefetch = 0 : i64, scratch_operands = 0 : i64, tpu.core_type = #tpu.core_type<tc>, window_params = [{transform_indices = @transform_0, window_bounds = array<i64: 1, 2, 128>}, {transform_indices = @transform_1, window_bounds = array<i64: 1, 2, 128>}]} {
    %0 = tpu.iota {dimensions = array<i32: 1>} : vector<1x2x128xi32>
    %c2_i32 = arith.constant 2 : i32
    %1 = arith.muli %arg0, %c2_i32 : i32
    %2 = vector.broadcast %1 : i32 to vector<1x2x128xi32>
    %3 = arith.addi %2, %0 : vector<1x2x128xi32>
    %4 = tpu.iota {dimensions = array<i32: 2>} : vector<1x2x128xi32>
    %c4_i32 = arith.constant 4 : i32
    %5 = vector.broadcast %c4_i32 : i32 to vector<1x2x128xi32>
    %6 = arith.muli %3, %5 : vector<1x2x128xi32>
    %c5_i32 = arith.constant 5 : i32
    %7 = vector.broadcast %c5_i32 : i32 to vector<1x2x128xi32>
    %8 = arith.shrsi %4, %7 : vector<1x2x128xi32>
    %9 = arith.addi %6, %8 : vector<1x2x128xi32>
    %10 = tpu.iota {dimensions = array<i32: 2>} : vector<1x1x128xi32>
    %c31_i32 = arith.constant 31 : i32
    %11 = vector.broadcast %c31_i32 : i32 to vector<1x1x128xi32>
    %12 = arith.andi %10, %11 : vector<1x1x128xi32>
    %13 = arith.sitofp %12 : vector<1x1x128xi32> to vector<1x1x128xf32>
    %cst = arith.constant -0.287823141 : f32
    %14 = vector.broadcast %cst : f32 to vector<1x1x128xf32>
    %15 = arith.mulf %13, %14 : vector<1x1x128xf32>
    %16 = math.exp %15 : vector<1x1x128xf32>
    %17 = arith.sitofp %9 : vector<1x2x128xi32> to vector<1x2x128xf32>
    %18 = vector.broadcast %16 : vector<1x1x128xf32> to vector<1x2x128xf32>
    %19 = arith.mulf %17, %18 : vector<1x2x128xf32>
    %c1_i32 = arith.constant 1 : i32
    %20 = vector.broadcast %c1_i32 : i32 to vector<1x2x128xi32>
    %21 = arith.andi %9, %20 : vector<1x2x128xi32>
    %c0_i32 = arith.constant 0 : i32
    %22 = vector.broadcast %c0_i32 : i32 to vector<1x2x128xi32>
    %23 = arith.cmpi eq, %21, %22 : vector<1x2x128xi32>
    %24 = math.sin %19 : vector<1x2x128xf32>
    %25 = math.cos %19 : vector<1x2x128xf32>
    %26 = arith.select %23, %24, %25 : vector<1x2x128xi1>, vector<1x2x128xf32>
    %c0 = arith.constant 0 : index
    %c0_0 = arith.constant 0 : index
    %c0_1 = arith.constant 0 : index
    %27 = vector.load %arg2[%c0, %c0_0, %c0_1] : memref<1x2x128xf32, #tpu.memory_space<vmem>>, vector<1x2x128xf32>
    %28 = arith.addf %27, %26 : vector<1x2x128xf32>
    %c0_2 = arith.constant 0 : index
    %c0_3 = arith.constant 0 : index
    %c0_4 = arith.constant 0 : index
    %29 = vector.load %arg3[%c0_2, %c0_3, %c0_4] : memref<1x2x128xf32, #tpu.memory_space<vmem>>, vector<1x2x128xf32>
    tpu.vector_store %arg3[%c0_2, %c0_3, %c0_4], %28 {strides = array<i32>} : memref<1x2x128xf32, #tpu.memory_space<vmem>>, vector<1x2x128xf32>,
    return
  }
  func.func @transform_0(%arg0: i32, %arg1: i32) -> (i32, i32, i32) {
    %c0_i32 = arith.constant 0 : i32
    %c0_i32_0 = arith.constant 0 : i32
    return %arg1, %arg0, %c0_i32 : i32, i32, i32
  }
  func.func @transform_1(%arg0: i32, %arg1: i32) -> (i32, i32, i32) {
    %c0_i32 = arith.constant 0 : i32
    %c0_i32_0 = arith.constant 0 : i32
    return %arg1, %arg0, %c0_i32 : i32, i32, i32
  }
}

</mosaic_0001>

<llo_original>
// kernel: tpu_custom_call.1
$region0: #{tpu_custom_call.1}
  #allocation0 [shape = 'u32[]', space=smem, size = 0x4, offset = 0x4, fixed_abs, tag = 'smem constant byte address 0x4 - core index']
  #allocation1 [shape = 'u32[144,128]{1,0:T(1,128)}', space=vmem, size = 0x12000, scoped, tag = 'internal scratch']
  %s0 = inlined_call_operand.hbm [shape: f32[2,2,128], index: 0, kind: input, shape index: {}]
  %s1 = inlined_call_operand.hbm [shape: f32[2,2,128], index: 1, kind: output, shape index: {}]
  %s2 = sld [smem:[#allocation0]]
  $region41: #{tpu_custom_call.1} parent=0
    _
  %s4 = ssub.s32 1, %s2
  %s5 = scalar_select 0, %s4, %s2
  $region1: #{tpu_custom_call.1} parent=0
    #allocation2 [shape = 'u8[2048]{0}', space=vmem, size = 0x800, scoped, tag = 'input window, operand 0']
    #allocation3 [shape = 's32[2]{0}', space=sflag, size = 0x8, scoped, tag = 'scoped memory for tpu_custom_call.1']
    #allocation4 [shape = 's32[2]{0}', space=sflag, size = 0x8, scoped, tag = 'scoped memory for tpu_custom_call.1']
    #allocation5 [shape = 'u8[2048]{0}', space=vmem, size = 0x800, scoped, tag = 'output window, operand 0']
    %6 = vsyncpa [#allocation3], 0
    %s7 = scalar_lea.sflag [#allocation3], 1
    %8 = vsyncpa %s7, 0
    %9 = vsyncpa [#allocation4], 0
    %s10 = scalar_lea.sflag [#allocation4], 1
    %11 = vsyncpa %s10, 0
    loop: start=0, step=1, limit=4
    $region2: #{tpu_custom_call.1} parent=1 // loop_pre_header
      _
    $region3: #{tpu_custom_call.1} parent=1 // loop_header
      %s13 = sphi 0, %s17
      %p14 = scmp.ge.s32.totalorder %s13, 4
      %s20 = sphi 0, %s32
      %s21 = sphi 0, %s28
      %s22 = sphi 0, %s20
      %s23 = sphi 0, %s21
      %s24 = sphi 0, %s22
      %s25 = sphi 0, %s23
      %s37 = sphi 0, %s39
      %s40 = sphi 0, %s37
      %s41 = sphi 0, %s40
      %s57 = sphi 0, %s41
      %s65 = sphi 0, %s67
      %s68 = sphi 0, %s65
      %s69 = sphi 0, %s68
      %s85 = sphi 0, %s69
    $region4: #{tpu_custom_call.1} parent=1 // loop_header_branch
      %16 = sbr.rel (%p14) target = $region8
    $region5: #{tpu_custom_call.1} parent=1 // loop_body
      %s18 = ssub.s32 %s13, 1
      %s19 = ssub.s32 %s13, 2
      %s26 = sadd.s32 1, %s21
      %p27 = scmp.ge.s32.totalorder %s26, 2
      %s28 = scalar_select %p27, 0, %s26
      %s29 = sadd.s32 1, %s20
      %s30 = scalar_select %p27, %s29, %s20
      %p31 = scmp.ge.s32.totalorder %s30, 1
      %s32 = scalar_select %p31, 0, %s30
      %s33 = ssub.s32 %s21, %s28
      %s34 = ssub.s32 %s20, %s32
      %s35 = sor.u32 %s33, %s34
      %p36 = scmp.eq.s32.totalorder %s35, 0
      %s38 = sadd.s32 %s37, 1
      %s39 = scalar_select %p36, %s37, %s38
      %p42 = pneg %p36
      %p43 = scmp.eq.s32.totalorder %s13, 1
      %p44 = por %p42, %p43
      %p45 = scmp.ne.s32.totalorder %s37, %s40
      %p46 = scmp.eq.s32.totalorder %s13, 0
      %p47 = por %p45, %p46
      %p48 = scmp.ne.s32.totalorder %s37, %s40
      %p49 = scmp.eq.s32.totalorder %s18, 1
      %p50 = por %p48, %p49
      %p51 = scmp.ne.s32.totalorder %s40, %s41
      %p52 = scmp.eq.s32.totalorder %s18, 0
      %p53 = por %p51, %p52
      %p54 = scmp.ne.s32.totalorder %s40, %s41
      %p55 = scmp.eq.s32.totalorder %s19, 1
      %p56 = por %p54, %p55
      %p58 = scmp.ne.s32.totalorder %s41, %s57
      %p59 = scmp.eq.s32.totalorder %s19, 0
      %p60 = por %p58, %p59
      %s61 = ssub.s32 %s21, %s28
      %s62 = ssub.s32 %s20, %s32
      %s63 = sor.u32 %s61, %s62
      %p64 = scmp.eq.s32.totalorder %s63, 0
      %s66 = sadd.s32 %s65, 1
      %s67 = scalar_select %p64, %s65, %s66
      %p70 = pneg %p64
      %p71 = scmp.eq.s32.totalorder %s13, 1
      %p72 = por %p70, %p71
      %p73 = scmp.ne.s32.totalorder %s65, %s68
      %p74 = scmp.eq.s32.totalorder %s13, 0
      %p75 = por %p73, %p74
      %p76 = scmp.ne.s32.totalorder %s65, %s68
      %p77 = scmp.eq.s32.totalorder %s18, 1
      %p78 = por %p76, %p77
      %p79 = scmp.ne.s32.totalorder %s68, %s69
      %p80 = scmp.eq.s32.totalorder %s18, 0
      %p81 = por %p79, %p80
      %p82 = scmp.ne.s32.totalorder %s68, %s69
      %p83 = scmp.eq.s32.totalorder %s19, 1
      %p84 = por %p82, %p83
      %p86 = scmp.ne.s32.totalorder %s69, %s85
      %p87 = scmp.eq.s32.totalorder %s19, 0
      %p88 = por %p86, %p87
      %p89 = scmp.le.s32.totalorder 1, %s13
      %p90 = scmp.lt.s32.totalorder %s13, 3
      %p91 = pnand %p89, %p90
      %p92 = pneg %p91
      // Predicated region
      $region9: #{tpu_custom_call.1} parent=5 // pred_check
        _
      $region10: #{tpu_custom_call.1} parent=5 // pred_check_branch
        %94 = sbr.rel (%p91) target = $region12
      $region11: #{tpu_custom_call.1} parent=5 // pred_region
        %s95 = ssub.s32 %s13, 1
      $region12: #{tpu_custom_call.1} parent=5 // pred_fallthru
        _
      %p96 = scmp.lt.s32.totalorder %s13, 2
      // Predicated region
      $region13: #{tpu_custom_call.1} parent=5 // pred_check
        %p97 = pneg %p96
      $region14: #{tpu_custom_call.1} parent=5 // pred_check_branch
        %99 = sbr.rel (%p97) target = $region16
      $region15: #{tpu_custom_call.1} parent=5 // pred_region
        // Predicated region
        $region17: #{tpu_custom_call.1} parent=15 // pred_check
          %p100 = pneg %p47
        $region18: #{tpu_custom_call.1} parent=15 // pred_check_branch
          %102 = sbr.rel (%p100) target = $region20
        $region19: #{tpu_custom_call.1} parent=15 // pred_region
          %s103 = sand.u32 %s37, 1
          %s104 = scalar_lea.sflag [#allocation3], %s103
          %s105 = sand.u32 %s37, 1
          %s106 = smul.addr %s105, 2
          %s107 = scalar_lea.vmem [#allocation2], %s106
          %s109 = ssub.s32 32, 32
          %110 = vsyncadd %s104, %s109
          %s111 = sadd.s32 %s20, %s21
          %s112 = smul.addr %s111, 32
          %s113 = scalar_lea.hbm %s0, %s112
          %s115 = sshll.u32 %s107, 4
          %s116 = int_to_ptr.vmem [resolvable:$true] %s115
          %118 = dma.hbm_to_vmem [thread:$0]  %s113, 32, %s116, %s104
        $region20: #{tpu_custom_call.1} parent=15 // pred_fallthru
          _
      $region16: #{tpu_custom_call.1} parent=5 // pred_fallthru
        _
      %p119 = scmp.le.s32.totalorder 1, %s13
      %p120 = scmp.lt.s32.totalorder %s13, 3
      %p121 = pnand %p119, %p120
      %p122 = pneg %p121
      // Predicated region
      $region21: #{tpu_custom_call.1} parent=5 // pred_check
        _
      $region22: #{tpu_custom_call.1} parent=5 // pred_check_branch
        %124 = sbr.rel (%p121) target = $region24
      $region23: #{tpu_custom_call.1} parent=5 // pred_region
        %s125 = ssub.s32 %s13, 1
        %s126 = sand.u32 %s40, 1
        %s127 = scalar_lea.sflag [#allocation3], %s126
        %s128 = sand.u32 %s40, 1
        %s129 = smul.addr %s128, 2
        %s130 = scalar_lea.vmem [#allocation2], %s129
        // Predicated region
        $region25: #{tpu_custom_call.1} parent=23 // pred_check
          %p131 = pneg %p53
        $region26: #{tpu_custom_call.1} parent=23 // pred_check_branch
          %133 = sbr.rel (%p131) target = $region28
        $region27: #{tpu_custom_call.1} parent=23 // pred_region
          %134 = dma.done %s127, 32
        $region28: #{tpu_custom_call.1} parent=23 // pred_fallthru
          _
        %s135 = sand.u32 %s40, 1
        %s136 = scalar_lea.sflag [#allocation3], %s135
        %s137 = sand.u32 %s40, 1
        %s138 = smul.addr %s137, 2
        %s139 = scalar_lea.vmem [#allocation2], %s138
        %p140 = pneg %p53
        %p141 = pneg %p50
        %p142 = pneg %p81
        %p143 = pneg %p78
        %s144 = sand.u32 %s68, 1
        %s145 = scalar_lea.sflag [#allocation4], %s144
        %s146 = sand.u32 %s68, 1
        %s147 = smul.addr %s146, 2
        %s148 = scalar_lea.vmem [#allocation5], %s147
        %v149 = vlaneseq
        %v150 = vshrl.u32 %v149, 7
        %s151 = smul.u32 %s22, 2
        %v152 = vstv %s151
        %v153 = vadd.s32 %v152, %v150
        %v154 = vlaneseq
        %v155 = vand.u32 %v154, 127
        %v156 = vmul.u32 %v153, 4
        %v157 = vshra.s32 %v155, 5
        %v158 = vadd.s32 %v156, %v157
        %v159 = vand.u32 %v155, 31
        %v160 = vcvt.s32.f32 %v159
        %v161 = vmul.f32 %v160, -0.28782314
        %v162 = vmul.f32 %v161, 1.442695
        %v163 = vpow.pop %v162
        %v164 = vcvt.s32.f32 %v158
        %v165 = vmul.f32 %v164, %v163
        %v166 = vand.u32 %v158, 1
        %vm167 = vcmp.eq.s32.totalorder %v166, 0
        %v168 = vand.u32 2147483647, %v165
        %vm169 = vcmp.le.f32.partialorder %v168, 0.7853982
        %vm170 = vcmp.lt.s32.totalorder %v165, 0
        %v171 = vand.u32 %v165, 2139095040
        %v172 = vshrl.u32 %v171, 23
        %v173 = vsub.s32 %v172, 127
        %v174 = vand.u32 2147483647, %v165
        %v175 = vand.u32 %v174, 8388607
        %v176 = vor.u32 %v175, 8388608
        %v177 = vsub.s32 0, %v176
        %v178 = vadd.s32 %v173, 1
        %vm179 = vcmp.gt.s32.totalorder %v178, 0
        %v180 = vsel %vm179, %v178, 0
        %v181 = vshrl.u32 %v180, 5
        %v182 = vand.u32 %v180, 31
        %v183 = vsub.s32 32, %v182
        %v184 = vshrl.u32 683565275, %v183
        %v185 = vshll.u32 683565275, %v182
        %v186 = vshrl.u32 2475754826, %v183
        %v187 = vor.u32 %v185, %v186
        %v188 = vshll.u32 2475754826, %v182
        %v189 = vshrl.u32 2131351028, %v183
        %v190 = vor.u32 %v188, %v189
        %v191 = vshll.u32 2131351028, %v182
        %v192 = vshrl.u32 2102212464, %v183
        %v193 = vor.u32 %v191, %v192
        %v194 = vshll.u32 2102212464, %v182
        %v195 = vshrl.u32 920167782, %v183
        %v196 = vor.u32 %v194, %v195
        %v197 = vshll.u32 920167782, %v182
        %v198 = vshrl.u32 1326507024, %v183
        %v199 = vor.u32 %v197, %v198
        %vm200 = vcmp.lt.s32.totalorder %v181, 1
        %vm201 = vcmp.lt.s32.totalorder %v181, 2
        %vm202 = vcmp.lt.s32.totalorder %v181, 3
        %vm203 = vcmp.lt.s32.totalorder %v181, 4
        %v204 = vsel %vm200, %v184, %v187
        %v205 = vsel %vm203, %v193, 2102212464
        %v206 = vsel %vm202, %v190, %v205
        %v207 = vsel %vm201, %v204, %v206
        %v208 = vsel %vm200, %v187, %v190
        %v209 = vsel %vm203, %v196, 920167782
        %v210 = vsel %vm202, %v193, %v209
        %v211 = vsel %vm201, %v208, %v210
        %v212 = vsel %vm200, %v190, %v193
        %v213 = vsel %vm203, %v199, 1326507024
        %v214 = vsel %vm202, %v196, %v213
        %v215 = vsel %vm201, %v212, %v214
        %v216 = vshll.u32 %v176, 8
        %v217 = vmul.u32.u64.compose %v216, %v215
        %v218 = vextract.low.u32 %v217
        %v219 = vextract.high.u32 %v217
        %v220 = vmul.u32.u64.compose %v216, %v211
        %v221 = vextract.low.u32 %v220
        %v222 = vextract.high.u32 %v220
        %v223 = vmul.u32 %v216, %v207
        %v224 = vadd.s32 %v219, %v221
        %vm225 = vc.u32 %v219, %v221
        %v226 = vadd.s32 %v222, 1
        %v227 = vsel %vm225, %v226, %v222
        %v228 = vadd.s32 %v223, %v227
        %v229 = vadd.s32 %v228, 536870912
        %v230 = vshrl.u32 %v229, 30
        %v231 = vshll.u32 %v230, 30
        %v232 = vsub.s32 %v228, %v231
        %vm233 = vcmp.lt.s32.totalorder %v232, 0
        %v234 = vsub.s32 0, %v232
        %v235 = vsel %vm233, %v234, %v232
        %v236 = vclz %v235
        %v237 = vsub.s32 %v236, 2
        %vm238 = vcmp.gt.s32.totalorder 0, %v237
        %v239 = vsel %vm238, 0, %v237
        %v240 = vsub.s32 32, %v239
        %v241 = vshll.u32 %v232, %v239
        %v242 = vshrl.u32 %v224, %v240
        %v243 = vor.u32 %v241, %v242
        %v244 = vsub.s32 4294967266, %v239
        %v245 = vadd.s32 %v244, 127
        %v246 = vshll.u32 %v245, 23
        %v247 = vor.u32 4788187, %v246
        %v248 = vand.u32 2147483647, %v247
        %v250 = vcvt.s32.f32 %v243
        %v251 = vmul.f32 %v250, %v248
        %v252 = vxor.u32 %v251, 2147483648
        %v253 = vsel %vm170, %v252, %v251
        %v254 = vsub.s32 4, %v230
        %v255 = vsel %vm170, %v254, %v230
        %v256 = vsel %vm169, %v165, %v253
        %v257 = vsel %vm169, 0, %v255
        %v258 = vcosq.f32.pop %v256
        %v259 = vsinq.f32.pop %v256
        %vm260 = vweird.f32 %v165
        %v261 = vadd.s32 %v257, 3
        %v262 = vand.u32 %v261, 3
        %vm263 = vcmp.lt.s32.totalorder %v262, 2
        %vm264 = vcmp.eq.s32.totalorder %v262, 0
        %v265 = vxor.u32 %v259, 2147483648
        %v266 = vsel %vm264, %v258, %v265
        %vm267 = vcmp.eq.s32.totalorder %v262, 2
        %v268 = vxor.u32 %v258, 2147483648
        %v269 = vsel %vm267, %v268, %v259
        %v270 = vsel %vm263, %v266, %v269
        %v271 = vsel %vm260, nan, %v270
        %v272 = vand.u32 2147483647, %v165
        %vm273 = vcmp.le.f32.partialorder %v272, 0.7853982
        %vm274 = vcmp.lt.s32.totalorder %v165, 0
        %v275 = vand.u32 %v165, 2139095040
        %v276 = vshrl.u32 %v275, 23
        %v277 = vsub.s32 %v276, 127
        %v278 = vand.u32 2147483647, %v165
        %v279 = vand.u32 %v278, 8388607
        %v280 = vor.u32 %v279, 8388608
        %v281 = vsub.s32 0, %v280
        %v282 = vadd.s32 %v277, 1
        %vm283 = vcmp.gt.s32.totalorder %v282, 0
        %v284 = vsel %vm283, %v282, 0
        %v285 = vshrl.u32 %v284, 5
        %v286 = vand.u32 %v284, 31
        %v287 = vsub.s32 32, %v286
        %v288 = vshrl.u32 683565275, %v287
        %v289 = vshll.u32 683565275, %v286
        %v290 = vshrl.u32 2475754826, %v287
        %v291 = vor.u32 %v289, %v290
        %v292 = vshll.u32 2475754826, %v286
        %v293 = vshrl.u32 2131351028, %v287
        %v294 = vor.u32 %v292, %v293
        %v295 = vshll.u32 2131351028, %v286
        %v296 = vshrl.u32 2102212464, %v287
        %v297 = vor.u32 %v295, %v296
        %v298 = vshll.u32 2102212464, %v286
        %v299 = vshrl.u32 920167782, %v287
        %v300 = vor.u32 %v298, %v299
        %v301 = vshll.u32 920167782, %v286
        %v302 = vshrl.u32 1326507024, %v287
        %v303 = vor.u32 %v301, %v302
        %vm304 = vcmp.lt.s32.totalorder %v285, 1
        %vm305 = vcmp.lt.s32.totalorder %v285, 2
        %vm306 = vcmp.lt.s32.totalorder %v285, 3
        %vm307 = vcmp.lt.s32.totalorder %v285, 4
        %v308 = vsel %vm304, %v288, %v291
        %v309 = vsel %vm307, %v297, 2102212464
        %v310 = vsel %vm306, %v294, %v309
        %v311 = vsel %vm305, %v308, %v310
        %v312 = vsel %vm304, %v291, %v294
        %v313 = vsel %vm307, %v300, 920167782
        %v314 = vsel %vm306, %v297, %v313
        %v315 = vsel %vm305, %v312, %v314
        %v316 = vsel %vm304, %v294, %v297
        %v317 = vsel %vm307, %v303, 1326507024
        %v318 = vsel %vm306, %v300, %v317
        %v319 = vsel %vm305, %v316, %v318
        %v320 = vshll.u32 %v280, 8
        %v321 = vmul.u32.u64.compose %v320, %v319
        %v322 = vextract.low.u32 %v321
        %v323 = vextract.high.u32 %v321
        %v324 = vmul.u32.u64.compose %v320, %v315
        %v325 = vextract.low.u32 %v324
        %v326 = vextract.high.u32 %v324
        %v327 = vmul.u32 %v320, %v311
        %v328 = vadd.s32 %v323, %v325
        %vm329 = vc.u32 %v323, %v325
        %v330 = vadd.s32 %v326, 1
        %v331 = vsel %vm329, %v330, %v326
        %v332 = vadd.s32 %v327, %v331
        %v333 = vadd.s32 %v332, 536870912
        %v334 = vshrl.u32 %v333, 30
        %v335 = vshll.u32 %v334, 30
        %v336 = vsub.s32 %v332, %v335
        %vm337 = vcmp.lt.s32.totalorder %v336, 0
        %v338 = vsub.s32 0, %v336
        %v339 = vsel %vm337, %v338, %v336
        %v340 = vclz %v339
        %v341 = vsub.s32 %v340, 2
        %vm342 = vcmp.gt.s32.totalorder 0, %v341
        %v343 = vsel %vm342, 0, %v341
        %v344 = vsub.s32 32, %v343
        %v345 = vshll.u32 %v336, %v343
        %v346 = vshrl.u32 %v328, %v344
        %v347 = vor.u32 %v345, %v346
        %v348 = vsub.s32 4294967266, %v343
        %v349 = vadd.s32 %v348, 127
        %v350 = vshll.u32 %v349, 23
        %v351 = vor.u32 4788187, %v350
        %v352 = vand.u32 2147483647, %v351
        %v354 = vcvt.s32.f32 %v347
        %v355 = vmul.f32 %v354, %v352
        %v356 = vxor.u32 %v355, 2147483648
        %v357 = vsel %vm274, %v356, %v355
        %v358 = vsub.s32 4, %v334
        %v359 = vsel %vm274, %v358, %v334
        %v360 = vsel %vm273, %v165, %v357
        %v361 = vsel %vm273, 0, %v359
        %v362 = vcosq.f32.pop %v360
        %v363 = vsinq.f32.pop %v360
        %vm364 = vweird.f32 %v165
        %v365 = vand.u32 %v361, 3
        %vm366 = vcmp.lt.s32.totalorder %v365, 2
        %vm367 = vcmp.eq.s32.totalorder %v365, 0
        %v368 = vxor.u32 %v363, 2147483648
        %v369 = vsel %vm367, %v362, %v368
        %vm370 = vcmp.eq.s32.totalorder %v365, 2
        %v371 = vxor.u32 %v362, 2147483648
        %v372 = vsel %vm370, %v371, %v363
        %v373 = vsel %vm366, %v369, %v372
        %v374 = vsel %vm364, nan, %v373
        %v375 = vsel %vm167, %v271, %v374
        %v376 = vld [vmem:[%s130] sm:$0x3]
        %v377 = vadd.f32 %v376, %v375
        %378 = vst [vmem:[%s148] sm:$0x3] %v377
        %s379 = sand.u32 %s68, 1
        %s380 = scalar_lea.sflag [#allocation4], %s379
        %s381 = sand.u32 %s68, 1
        %s382 = smul.addr %s381, 2
        %s383 = scalar_lea.vmem [#allocation5], %s382
        // Predicated region
        $region29: #{tpu_custom_call.1} parent=23 // pred_check
          %p384 = pneg %p78
        $region30: #{tpu_custom_call.1} parent=23 // pred_check_branch
          %386 = sbr.rel (%p384) target = $region32
        $region31: #{tpu_custom_call.1} parent=23 // pred_region
          %s388 = ssub.s32 32, 32
          %389 = vsyncadd %s380, %s388
          %s390 = sadd.s32 %s22, %s23
          %s391 = smul.addr %s390, 32
          %s392 = scalar_lea.hbm %s1, %s391
          %s394 = sshll.u32 %s383, 4
          %s395 = int_to_ptr.vmem [resolvable:$true] %s394
          %397 = dma.vmem_to_hbm [thread:$0]  %s395, 32, %s392, %s380
        $region32: #{tpu_custom_call.1} parent=23 // pred_fallthru
          _
      $region24: #{tpu_custom_call.1} parent=5 // pred_fallthru
        _
      %p398 = scmp.le.s32.totalorder 2, %s13
      // Predicated region
      $region33: #{tpu_custom_call.1} parent=5 // pred_check
        %p399 = pneg %p398
      $region34: #{tpu_custom_call.1} parent=5 // pred_check_branch
        %401 = sbr.rel (%p399) target = $region36
      $region35: #{tpu_custom_call.1} parent=5 // pred_region
        %s402 = ssub.s32 %s13, 2
        // Predicated region
        $region37: #{tpu_custom_call.1} parent=35 // pred_check
          %p403 = pneg %p84
        $region38: #{tpu_custom_call.1} parent=35 // pred_check_branch
          %405 = sbr.rel (%p403) target = $region40
        $region39: #{tpu_custom_call.1} parent=35 // pred_region
          %s406 = sand.u32 %s69, 1
          %s407 = scalar_lea.sflag [#allocation4], %s406
          %s408 = sand.u32 %s69, 1
          %s409 = smul.addr %s408, 2
          %s410 = scalar_lea.vmem [#allocation5], %s409
          %411 = dma.done %s407, 32
        $region40: #{tpu_custom_call.1} parent=35 // pred_fallthru
          _
      $region36: #{tpu_custom_call.1} parent=5 // pred_fallthru
        _
    $region6: #{tpu_custom_call.1} parent=1 // loop_footer
      %s17 = sadd.s32 1, %s13
    $region7: #{tpu_custom_call.1} parent=1 // loop_footer_branch
      %12 = sbr.rel target = $region3
    $region8: #{tpu_custom_call.1} parent=1 // loop_exit
      _
    %412 = vsyncpa [#allocation3], 1
    %s413 = scalar_lea.sflag [#allocation3], 1
    %414 = vsyncpa %s413, 1
    %415 = vsyncpa [#allocation4], 1
    %s416 = scalar_lea.sflag [#allocation4], 1
    %417 = vsyncpa %s416, 1

</llo_original>
